<compile_context>
chip_gen: v7x
topology: tpu7x:2x2x1
jax: 0.10.0
libtpu: 0.0.40
codegen_flags: <defaults>
</compile_context>

<pallas_src>
import functools

import jax
import jax.numpy as jnp
from jax import lax
from jax.experimental import pallas as pl
from jax.experimental.pallas import tpu as pltpu

_LANE = 128


def _round_up(x, m):
    return (x + m - 1) // m * m


def _vmem_limit_bytes():
    # ~3/4 of physical VMEM: ~96 MiB on v5e/v6e (128 MiB), ~48 MiB on v7x (64 MiB).
    try:
        cap = int(pltpu.get_tpu_info().vmem_capacity_bytes)
        if cap <= 0:
            raise ValueError(cap)
    except Exception:
        cap = 64 * 1024 * 1024
    return (cap // 4) * 3


def _conv_stats_kernel(p_ref, w_ref, o_ref, sum_ref, sq_ref, acc_ref, *, n_k):
    """One (TM, TK) x (TK, Cout_p) MXU matmul per step + fused BN partial stats.

    p_ref:   (TM, TK)      im2col patches (compute dtype)
    w_ref:   (TK, Cout_p)  folded conv weights
    o_ref:   (TM, Cout_p)  conv intermediate (compute dtype), written at last k
    sum_ref: (8, Cout_p)   per-row-tile sum(conv)   (broadcast over sublanes)
    sq_ref:  (8, Cout_p)   per-row-tile sum(conv^2)
    acc_ref: (TM, Cout_p)  f32 scratch accumulator (only used when n_k > 1)
    """
    k = pl.program_id(1)
    part = jnp.dot(p_ref[...], w_ref[...], preferred_element_type=jnp.float32)

    if n_k > 1:
        @pl.when(k == 0)
        def _():
            acc_ref[...] = jnp.zeros_like(acc_ref)
        acc_ref[...] += part

    @pl.when(k == n_k - 1)
    def _():
        acc = part if n_k == 1 else acc_ref[...]
        o_ref[...] = acc.astype(o_ref.dtype)
        s = jnp.sum(acc, axis=0, keepdims=True)
        sq = jnp.sum(acc * acc, axis=0, keepdims=True)
        sum_ref[...] = jnp.broadcast_to(s, sum_ref.shape)
        sq_ref[...] = jnp.broadcast_to(sq, sq_ref.shape)


def _bn_relu_kernel(x_ref, scale_ref, shift_ref, o_ref):
    """y = relu(x * scale + shift) on lane-dense (TM, Cout_p) tiles, f32 math."""
    y = x_ref[...].astype(jnp.float32) * scale_ref[...] + shift_ref[...]
    o_ref[...] = jnp.maximum(y, 0.0).astype(o_ref.dtype)


def basic_conv_forward(x_nchw, weight_oihw, gamma, beta, *, padding=1,
                       eps=1e-5, compute_dtype=jnp.bfloat16):
    """BasicConv forward: Conv2d(stride=1, bias=False) + BN(batch stats) + ReLU.

    compute_dtype: dtype fed to the MXU and used for the conv intermediate in
    HBM. bf16 (default) is ~2x MXU rate on v6e/v7x and halves HBM bytes;
    accumulation, BN statistics and the normalize/ReLU epilogue stay f32.
    Pass jnp.float32 for bit-tight accuracy (e.g. on v5e).
    """
    # TODO(synk): stride>1 / dilation>1 / groups>1 paths not implemented.
    N, Cin, H, W = x_nchw.shape
    Cout, _, KH, KW = weight_oihw.shape
    H_out = H + 2 * padding - (KH - 1)
    W_out = W + 2 * padding - (KW - 1)
    M = N * H_out * W_out

    k_real = KH * KW * Cin
    k_pad = _round_up(k_real, _LANE)
    cout_p = _round_up(Cout, _LANE)

    # Row tiling: pass 1 uses ~256-row tiles (several parallel grid points even
    # at batch 1), pass 2 uses the largest 512..2048-row tile dividing padded M.
    tm1 = min(256, _round_up(M, 8))
    m_pad = _round_up(M, tm1)
    tm2 = tm1
    for cand in (2048, 1024, 512):
        if m_pad % cand == 0:
            tm2 = cand
            break
    tk = k_pad if k_pad <= 512 else next(t for t in (512, 256, 128) if k_pad % t == 0)
    n_k = k_pad // tk
    n_row_tiles = m_pad // tm1
    vmem_limit = _vmem_limit_bytes()

    # ---- layout glue (wrapper-side XLA): NCHW -> NHWC, spatial zero-pad, and
    # im2col so the 128-lane padding of (KH*KW*Cin) is paid once, not per tap.
    # TODO(synk): keep activations NHWC / flat (M, C) across chained layers to
    # drop the NCHW<->NHWC boundary transposes; for Cin >= 128 a tap-loop kernel
    # over a halo'd NHWC block avoids the KH*KW im2col HBM amplification.
    x = jnp.transpose(x_nchw, (0, 2, 3, 1))
    x = jnp.pad(x, ((0, 0), (padding, padding), (padding, padding), (0, 0)))
    taps = [
        lax.slice(x, (0, kh, kw, 0), (N, kh + H_out, kw + W_out, Cin))
        for kh in range(KH) for kw in range(KW)
    ]
    patches = jnp.concatenate(taps, axis=-1).reshape(M, k_real).astype(compute_dtype)
    patches = jnp.pad(patches, ((0, m_pad - M), (0, k_pad - k_real)))

    w = jnp.transpose(weight_oihw, (2, 3, 1, 0)).reshape(k_real, Cout)
    w = jnp.pad(w.astype(compute_dtype), ((0, k_pad - k_real), (0, cout_p - Cout)))

    # ---- pass 1: conv (one lane-dense matmul per tile) + partial BN stats.
    conv_flat, psum, psq = pl.pallas_call(
        functools.partial(_conv_stats_kernel, n_k=n_k),
        grid=(n_row_tiles, n_k),
        in_specs=[
            pl.BlockSpec((tm1, tk), lambda i, k: (i, k)),
            pl.BlockSpec((tk, cout_p), lambda i, k: (k, 0)),
        ],
        out_specs=[
            pl.BlockSpec((tm1, cout_p), lambda i, k: (i, 0)),
            pl.BlockSpec((8, cout_p), lambda i, k: (i, 0)),
            pl.BlockSpec((8, cout_p), lambda i, k: (i, 0)),
        ],
        out_shape=[
            jax.ShapeDtypeStruct((m_pad, cout_p), compute_dtype),
            jax.ShapeDtypeStruct((n_row_tiles * 8, cout_p), jnp.float32),
            jax.ShapeDtypeStruct((n_row_tiles * 8, cout_p), jnp.float32),
        ],
        scratch_shapes=[pltpu.VMEM((tm1, cout_p), jnp.float32)],
        compiler_params=pltpu.CompilerParams(
            dimension_semantics=("parallel", "arbitrary"),
            vmem_limit_bytes=vmem_limit),
    )(patches, w)

    # ---- BN train-mode global stats (tiny per-channel f32 math). Zero-padded
    # rows contribute nothing to the sums; divide by the real element count.
    # TODO(synk): use a shifted/two-pass variance if E[x^2]-mean^2 cancellation
    # ever matters for very large N*H*W.
    count = jnp.float32(M)
    mean = jnp.sum(psum[::8], axis=0) / count
    var = jnp.maximum(jnp.sum(psq[::8], axis=0) / count - mean * mean, 0.0)
    gamma_p = jnp.pad(gamma.astype(jnp.float32), (0, cout_p - Cout))
    beta_p = jnp.pad(beta.astype(jnp.float32), (0, cout_p - Cout))
    inv_std = lax.rsqrt(var + eps)
    scale = (gamma_p * inv_std).reshape(1, cout_p)
    shift = (beta_p - mean * gamma_p * inv_std).reshape(1, cout_p)

    # ---- pass 2: normalize + ReLU on big lane-dense row tiles (HBM-bound).
    out_flat = pl.pallas_call(
        _bn_relu_kernel,
        grid=(m_pad // tm2,),
        in_specs=[
            pl.BlockSpec((tm2, cout_p), lambda i: (i, 0)),
            pl.BlockSpec((1, cout_p), lambda i: (0, 0)),
            pl.BlockSpec((1, cout_p), lambda i: (0, 0)),
        ],
        out_specs=pl.BlockSpec((tm2, cout_p), lambda i: (i, 0)),
        out_shape=jax.ShapeDtypeStruct((m_pad, cout_p), jnp.float32),
        compiler_params=pltpu.CompilerParams(
            dimension_semantics=("parallel",),
            vmem_limit_bytes=vmem_limit),
    )(conv_flat, scale, shift)

    # Crop padded rows / channels and return PyTorch-style NCHW.
    out = out_flat[:M, :Cout].reshape(N, H_out, W_out, Cout)
    return jnp.transpose(out, (0, 3, 1, 2))


def _reference(x_nchw, weight_oihw, gamma, beta, *, padding=1, eps=1e-5):
    """Pure-JAX reference (PyTorch BasicConv in train mode)."""
    conv = lax.conv_general_dilated(
        x_nchw, weight_oihw,
        window_strides=(1, 1),
        padding=((padding, padding), (padding, padding)),
        dimension_numbers=("NCHW", "OIHW", "NCHW"))
    mean = jnp.mean(conv, axis=(0, 2, 3), keepdims=True)
    var = jnp.mean((conv - mean) ** 2, axis=(0, 2, 3), keepdims=True)
    y = (conv - mean) * lax.rsqrt(var + eps) * gamma.reshape(1, -1, 1, 1) \
        + beta.reshape(1, -1, 1, 1)
    return jnp.maximum(y, 0.0)


if __name__ == "__main__":
    # BasicConv(C_in=4, C_out=8, kernel_size=3, stride=1, padding=1,
    #           bn=True, relu=True, bias=False)
    N, C_in, H, W = 2, 4, 16, 16
    C_out, K = 8, 3

    key = jax.random.PRNGKey(0)
    kx, kw = jax.random.split(key)
    x = jax.random.normal(kx, (N, C_in, H, W), dtype=jnp.float32)
    weight = jax.random.normal(kw, (C_out, C_in, K, K), dtype=jnp.float32) * 0.1
    gamma = jnp.ones((C_out,), jnp.float32)   # nn.BatchNorm2d affine weight default
    beta = jnp.zeros((C_out,), jnp.float32)   # nn.BatchNorm2d affine bias default

    # f32 path: bit-tight check against the f32 reference.
    fwd_f32 = jax.jit(functools.partial(basic_conv_forward, padding=1,
                                        compute_dtype=jnp.float32))
    out_f32 = jax.block_until_ready(fwd_f32(x, weight, gamma, beta))
    ref = _reference(x, weight, gamma, beta, padding=1)
    assert out_f32.shape == (N, C_out, H, W), out_f32.shape
    assert jnp.allclose(out_f32, ref, atol=2e-3, rtol=2e-3), \
        float(jnp.max(jnp.abs(out_f32 - ref)))

    # default bf16 MXU path: compare against a reference fed bf16-rounded inputs.
    fwd_bf16 = jax.jit(functools.partial(basic_conv_forward, padding=1))
    out_bf16 = jax.block_until_ready(fwd_bf16(x, weight, gamma, beta))
    x_q = x.astype(jnp.bfloat16).astype(jnp.float32)
    w_q = weight.astype(jnp.bfloat16).astype(jnp.float32)
    ref_q = _reference(x_q, w_q, gamma, beta, padding=1)
    assert out_bf16.shape == (N, C_out, H, W), out_bf16.shape
    assert jnp.allclose(out_bf16, ref_q, atol=3e-2, rtol=3e-2), \
        float(jnp.max(jnp.abs(out_bf16 - ref_q)))

    print("KERNEL_OK")
</pallas_src>

<mosaic_0001>
module attributes {stable_mosaic.version = 11 : i64} {
  func.func @_conv_stats_kernel(%arg0: i32, %arg1: i32, %arg2: memref<256x128xf32, #tpu.memory_space<vmem>>, %arg3: memref<128x128xf32, #tpu.memory_space<vmem>>, %arg4: memref<256x128xf32, #tpu.memory_space<vmem>>, %arg5: memref<8x128xf32, #tpu.memory_space<vmem>>, %arg6: memref<8x128xf32, #tpu.memory_space<vmem>>, %arg7: memref<256x128xf32, #tpu.memory_space<vmem>>) attributes {dimension_semantics = [#tpu.dimension_semantics<parallel>, #tpu.dimension_semantics<arbitrary>], iteration_bounds = array<i64: 2, 1>, scalar_prefetch = 0 : i64, scratch_operands = 1 : i64, tpu.core_type = #tpu.core_type<tc>, window_params = [{transform_indices = @transform_0, window_bounds = array<i64: 256, 128>}, {transform_indices = @transform_1, window_bounds = array<i64: 128, 128>}, {transform_indices = @transform_2, window_bounds = array<i64: 256, 128>}, {transform_indices = @transform_3, window_bounds = array<i64: 8, 128>}, {transform_indices = @transform_4, window_bounds = array<i64: 8, 128>}]} {
    %c0 = arith.constant 0 : index
    %c0_0 = arith.constant 0 : index
    %0 = vector.load %arg2[%c0, %c0_0] : memref<256x128xf32, #tpu.memory_space<vmem>>, vector<256x128xf32>
    %c0_1 = arith.constant 0 : index
    %c0_2 = arith.constant 0 : index
    %1 = vector.load %arg3[%c0_1, %c0_2] : memref<128x128xf32, #tpu.memory_space<vmem>>, vector<128x128xf32>
    %cst = arith.constant dense<0.000000e+00> : vector<256x128xf32>
    %2 = tpu.matmul %0, %1, %cst {dimension_numbers = #tpu.dot_dimension_numbers<[1], [0], [0], [1], [0, 0, 1, 1], [], []>} : vector<256x128xf32>, vector<128x128xf32>, vector<256x128xf32> -> vector<256x128xf32>
    %c0_i32 = arith.constant 0 : i32
    %3 = arith.cmpi eq, %arg1, %c0_i32 : i32
    %4 = arith.extui %3 : i1 to i32
    %c0_i32_3 = arith.constant 0 : i32
    %5 = arith.cmpi ne, %4, %c0_i32_3 : i32
    scf.if %5 {
      %c0_4 = arith.constant 0 : index
      %c0_5 = arith.constant 0 : index
      %6 = vector.load %arg4[%c0_4, %c0_5] : memref<256x128xf32, #tpu.memory_space<vmem>>, vector<256x128xf32>
      tpu.vector_store %arg4[%c0_4, %c0_5], %2 {strides = array<i32>} : memref<256x128xf32, #tpu.memory_space<vmem>>, vector<256x128xf32>,
      %cst_6 = arith.constant dense<0.000000e+00> : vector<128xf32>
      %7 = vector.multi_reduction <add>, %2, %cst_6 [0] : vector<256x128xf32> to vector<128xf32>
      %8 = vector.shape_cast %7 : vector<128xf32> to vector<1x128xf32>
      %9 = arith.mulf %2, %2 : vector<256x128xf32>
      %cst_7 = arith.constant dense<0.000000e+00> : vector<128xf32>
      %10 = vector.multi_reduction <add>, %9, %cst_7 [0] : vector<256x128xf32> to vector<128xf32>
      %11 = vector.shape_cast %10 : vector<128xf32> to vector<1x128xf32>
      %12 = vector.shape_cast %8 : vector<1x128xf32> to vector<1x128xf32>
      %13 = vector.broadcast %12 : vector<1x128xf32> to vector<8x128xf32>
      %c0_8 = arith.constant 0 : index
      %c0_9 = arith.constant 0 : index
      %14 = vector.load %arg5[%c0_8, %c0_9] : memref<8x128xf32, #tpu.memory_space<vmem>>, vector<8x128xf32>
      tpu.vector_store %arg5[%c0_8, %c0_9], %13 {strides = array<i32>} : memref<8x128xf32, #tpu.memory_space<vmem>>, vector<8x128xf32>,
      %15 = vector.shape_cast %11 : vector<1x128xf32> to vector<1x128xf32>
      %16 = vector.broadcast %15 : vector<1x128xf32> to vector<8x128xf32>
      %c0_10 = arith.constant 0 : index
      %c0_11 = arith.constant 0 : index
      %17 = vector.load %arg6[%c0_10, %c0_11] : memref<8x128xf32, #tpu.memory_space<vmem>>, vector<8x128xf32>
      tpu.vector_store %arg6[%c0_10, %c0_11], %16 {strides = array<i32>} : memref<8x128xf32, #tpu.memory_space<vmem>>, vector<8x128xf32>,
    } else {
    }
    return
  }
  func.func @transform_0(%arg0: i32, %arg1: i32) -> (i32, i32) {
    %c0_i32 = arith.constant 0 : i32
    return %arg0, %arg1 : i32, i32
  }
  func.func @transform_1(%arg0: i32, %arg1: i32) -> (i32, i32) {
    %c0_i32 = arith.constant 0 : i32
    %c0_i32_0 = arith.constant 0 : i32
    return %arg1, %c0_i32 : i32, i32
  }
  func.func @transform_2(%arg0: i32, %arg1: i32) -> (i32, i32) {
    %c0_i32 = arith.constant 0 : i32
    %c0_i32_0 = arith.constant 0 : i32
    return %arg0, %c0_i32 : i32, i32
  }
  func.func @transform_3(%arg0: i32, %arg1: i32) -> (i32, i32) {
    %c0_i32 = arith.constant 0 : i32
    %c0_i32_0 = arith.constant 0 : i32
    return %arg0, %c0_i32 : i32, i32
  }
  func.func @transform_4(%arg0: i32, %arg1: i32) -> (i32, i32) {
    %c0_i32 = arith.constant 0 : i32
    %c0_i32_0 = arith.constant 0 : i32
    return %arg0, %c0_i32 : i32, i32
  }
}

module attributes {stable_mosaic.version = 11 : i64} {
  func.func @_bn_relu_kernel(%arg0: i32, %arg1: memref<512x128xf32, #tpu.memory_space<vmem>>, %arg2: memref<1x128xf32, #tpu.memory_space<vmem>>, %arg3: memref<1x128xf32, #tpu.memory_space<vmem>>, %arg4: memref<512x128xf32, #tpu.memory_space<vmem>>) attributes {dimension_semantics = [#tpu.dimension_semantics<parallel>], iteration_bounds = array<i64: 1>, scalar_prefetch = 0 : i64, scratch_operands = 0 : i64, tpu.core_type = #tpu.core_type<tc>, window_params = [{transform_indices = @transform_0, window_bounds = array<i64: 512, 128>}, {pipeline_mode = #tpu.pipeline_mode<synchronous>, transform_indices = @transform_1, window_bounds = array<i64: 1, 128>}, {pipeline_mode = #tpu.pipeline_mode<synchronous>, transform_indices = @transform_2, window_bounds = array<i64: 1, 128>}, {transform_indices = @transform_3, window_bounds = array<i64: 512, 128>}]} {
    %c0 = arith.constant 0 : index
    %c0_0 = arith.constant 0 : index
    %0 = vector.load %arg1[%c0, %c0_0] : memref<512x128xf32, #tpu.memory_space<vmem>>, vector<512x128xf32>
    %c0_1 = arith.constant 0 : index
    %c0_2 = arith.constant 0 : index
    %1 = vector.load %arg2[%c0_1, %c0_2] : memref<1x128xf32, #tpu.memory_space<vmem>>, vector<1x128xf32>
    %2 = vector.broadcast %1 : vector<1x128xf32> to vector<512x128xf32>
    %3 = arith.mulf %0, %2 : vector<512x128xf32>
    %c0_3 = arith.constant 0 : index
    %c0_4 = arith.constant 0 : index
    %4 = vector.load %arg3[%c0_3, %c0_4] : memref<1x128xf32, #tpu.memory_space<vmem>>, vector<1x128xf32>
    %5 = vector.broadcast %4 : vector<1x128xf32> to vector<512x128xf32>
    %6 = arith.addf %3, %5 : vector<512x128xf32>
    %cst = arith.constant 0.000000e+00 : f32
    %7 = vector.broadcast %cst : f32 to vector<512x128xf32>
    %8 = arith.maximumf %6, %7 : vector<512x128xf32>
    %c0_5 = arith.constant 0 : index
    %c0_6 = arith.constant 0 : index
    %9 = vector.load %arg4[%c0_5, %c0_6] : memref<512x128xf32, #tpu.memory_space<vmem>>, vector<512x128xf32>
    tpu.vector_store %arg4[%c0_5, %c0_6], %8 {strides = array<i32>} : memref<512x128xf32, #tpu.memory_space<vmem>>, vector<512x128xf32>,
    return
  }
  func.func @transform_0(%arg0: i32) -> (i32, i32) {
    %c0_i32 = arith.constant 0 : i32
    %c0_i32_0 = arith.constant 0 : i32
    return %arg0, %c0_i32 : i32, i32
  }
  func.func @transform_1(%arg0: i32) -> (i32, i32) {
    %c0_i32 = arith.constant 0 : i32
    %c0_i32_0 = arith.constant 0 : i32
    %c0_i32_1 = arith.constant 0 : i32
    return %c0_i32, %c0_i32_0 : i32, i32
  }
  func.func @transform_2(%arg0: i32) -> (i32, i32) {
    %c0_i32 = arith.constant 0 : i32
    %c0_i32_0 = arith.constant 0 : i32
    %c0_i32_1 = arith.constant 0 : i32
    return %c0_i32, %c0_i32_0 : i32, i32
  }
  func.func @transform_3(%arg0: i32) -> (i32, i32) {
    %c0_i32 = arith.constant 0 : i32
    %c0_i32_0 = arith.constant 0 : i32
    return %arg0, %c0_i32 : i32, i32
  }
}

</mosaic_0001>

<llo_original>
// kernel: basic_conv_forward.3
$region0: #{basic_conv_forward.3}
  #allocation0 [shape = 'u32[]', space=smem, size = 0x4, offset = 0x4, fixed_abs, tag = 'smem constant byte address 0x4 - core index']
  #allocation1 [shape = 'u32[144,128]{1,0:T(1,128)}', space=vmem, size = 0x12000, scoped, tag = 'internal scratch']
  %s0 = inlined_call_operand.vmem [shape: f32[512,128], index: 0, kind: input, shape index: {}]
  %s1 = inlined_call_operand.vmem [shape: f32[1,128], index: 1, kind: input, shape index: {}]
  %s2 = inlined_call_operand.vmem [shape: f32[1,128], index: 2, kind: input, shape index: {}]
  %s3 = inlined_call_operand.vmem [shape: f32[512,128], index: 3, kind: output, shape index: {}]
  %s4 = sld [smem:[#allocation0]]
  $region22: #{basic_conv_forward.3} parent=0
    _
  %s6 = ssub.s32 1, %s4
  %s7 = scalar_select 0, %s6, %s4
  // Predicated region
  $region2: #{basic_conv_forward.3} parent=0 // pred_check
    _
  $region3: #{basic_conv_forward.3} parent=0 // pred_check_branch
    %9 = sbr.rel (0) target = $region5
  $region4: #{basic_conv_forward.3} parent=0 // pred_region
    _
  $region5: #{basic_conv_forward.3} parent=0 // pred_fallthru
    _
  // Predicated region
  $region6: #{basic_conv_forward.3} parent=0 // pred_check
    _
  $region7: #{basic_conv_forward.3} parent=0 // pred_check_branch
    %11 = sbr.rel (0) target = $region9
  $region8: #{basic_conv_forward.3} parent=0 // pred_region
    _
  $region9: #{basic_conv_forward.3} parent=0 // pred_fallthru
    _
  // Predicated region
  $region10: #{basic_conv_forward.3} parent=0 // pred_check
    _
  $region11: #{basic_conv_forward.3} parent=0 // pred_check_branch
    %13 = sbr.rel (0) target = $region13
  $region12: #{basic_conv_forward.3} parent=0 // pred_region
    _
  $region13: #{basic_conv_forward.3} parent=0 // pred_fallthru
    _
  %v14 = vld [vmem:[%s0] sm:$0xff]
  %v15 = vld [vmem:[%s0 + $0x8] sm:$0xff]
  %v16 = vld [vmem:[%s0 + $0x10] sm:$0xff]
  %v17 = vld [vmem:[%s0 + $0x18] sm:$0xff]
  %v18 = vld [vmem:[%s0 + $0x20] sm:$0xff]
  %v19 = vld [vmem:[%s0 + $0x28] sm:$0xff]
  %v20 = vld [vmem:[%s0 + $0x30] sm:$0xff]
  %v21 = vld [vmem:[%s0 + $0x38] sm:$0xff]
  %v22 = vld [vmem:[%s0 + $0x40] sm:$0xff]
  %v23 = vld [vmem:[%s0 + $0x48] sm:$0xff]
  %v24 = vld [vmem:[%s0 + $0x50] sm:$0xff]
  %v25 = vld [vmem:[%s0 + $0x58] sm:$0xff]
  %v26 = vld [vmem:[%s0 + $0x60] sm:$0xff]
  %v27 = vld [vmem:[%s0 + $0x68] sm:$0xff]
  %v28 = vld [vmem:[%s0 + $0x70] sm:$0xff]
  %v29 = vld [vmem:[%s0 + $0x78] sm:$0xff]
  %v30 = vld [vmem:[%s0 + $0x80] sm:$0xff]
  %v31 = vld [vmem:[%s0 + $0x88] sm:$0xff]
  %v32 = vld [vmem:[%s0 + $0x90] sm:$0xff]
  %v33 = vld [vmem:[%s0 + $0x98] sm:$0xff]
  %v34 = vld [vmem:[%s0 + $0xa0] sm:$0xff]
  %v35 = vld [vmem:[%s0 + $0xa8] sm:$0xff]
  %v36 = vld [vmem:[%s0 + $0xb0] sm:$0xff]
  %v37 = vld [vmem:[%s0 + $0xb8] sm:$0xff]
  %v38 = vld [vmem:[%s0 + $0xc0] sm:$0xff]
  %v39 = vld [vmem:[%s0 + $0xc8] sm:$0xff]
  %v40 = vld [vmem:[%s0 + $0xd0] sm:$0xff]
  %v41 = vld [vmem:[%s0 + $0xd8] sm:$0xff]
  %v42 = vld [vmem:[%s0 + $0xe0] sm:$0xff]
  %v43 = vld [vmem:[%s0 + $0xe8] sm:$0xff]
  %v44 = vld [vmem:[%s0 + $0xf0] sm:$0xff]
  %v45 = vld [vmem:[%s0 + $0xf8] sm:$0xff]
  %v46 = vld [vmem:[%s0 + $0x100] sm:$0xff]
  %v47 = vld [vmem:[%s0 + $0x108] sm:$0xff]
  %v48 = vld [vmem:[%s0 + $0x110] sm:$0xff]
  %v49 = vld [vmem:[%s0 + $0x118] sm:$0xff]
  %v50 = vld [vmem:[%s0 + $0x120] sm:$0xff]
  %v51 = vld [vmem:[%s0 + $0x128] sm:$0xff]
  %v52 = vld [vmem:[%s0 + $0x130] sm:$0xff]
  %v53 = vld [vmem:[%s0 + $0x138] sm:$0xff]
  %v54 = vld [vmem:[%s0 + $0x140] sm:$0xff]
  %v55 = vld [vmem:[%s0 + $0x148] sm:$0xff]
  %v56 = vld [vmem:[%s0 + $0x150] sm:$0xff]
  %v57 = vld [vmem:[%s0 + $0x158] sm:$0xff]
  %v58 = vld [vmem:[%s0 + $0x160] sm:$0xff]
  %v59 = vld [vmem:[%s0 + $0x168] sm:$0xff]
  %v60 = vld [vmem:[%s0 + $0x170] sm:$0xff]
  %v61 = vld [vmem:[%s0 + $0x178] sm:$0xff]
  %v62 = vld [vmem:[%s0 + $0x180] sm:$0xff]
  %v63 = vld [vmem:[%s0 + $0x188] sm:$0xff]
  %v64 = vld [vmem:[%s0 + $0x190] sm:$0xff]
  %v65 = vld [vmem:[%s0 + $0x198] sm:$0xff]
  %v66 = vld [vmem:[%s0 + $0x1a0] sm:$0xff]
  %v67 = vld [vmem:[%s0 + $0x1a8] sm:$0xff]
  %v68 = vld [vmem:[%s0 + $0x1b0] sm:$0xff]
  %v69 = vld [vmem:[%s0 + $0x1b8] sm:$0xff]
  %v70 = vld [vmem:[%s0 + $0x1c0] sm:$0xff]
  %v71 = vld [vmem:[%s0 + $0x1c8] sm:$0xff]
  %v72 = vld [vmem:[%s0 + $0x1d0] sm:$0xff]
  %v73 = vld [vmem:[%s0 + $0x1d8] sm:$0xff]
  %v74 = vld [vmem:[%s0 + $0x1e0] sm:$0xff]
  %v75 = vld [vmem:[%s0 + $0x1e8] sm:$0xff]
  %v76 = vld [vmem:[%s0 + $0x1f0] sm:$0xff]
  %v77 = vld [vmem:[%s0 + $0x1f8] sm:$0xff]
  %v78 = vld [vmem:[%s1] sm:$0x1]
  %v80 = vlaneseq
  %v81 = vshrl.u32 %v80, 7
  %v82 = vsub.s32 0, %v81
  %v83 = vrot.slane %v78, %v82
  %v85 = vmul.f32 %v14, %v83
  %v86 = vmul.f32 %v15, %v83
  %v87 = vmul.f32 %v16, %v83
  %v88 = vmul.f32 %v17, %v83
  %v89 = vmul.f32 %v18, %v83
  %v90 = vmul.f32 %v19, %v83
  %v91 = vmul.f32 %v20, %v83
  %v92 = vmul.f32 %v21, %v83
  %v93 = vmul.f32 %v22, %v83
  %v94 = vmul.f32 %v23, %v83
  %v95 = vmul.f32 %v24, %v83
  %v96 = vmul.f32 %v25, %v83
  %v97 = vmul.f32 %v26, %v83
  %v98 = vmul.f32 %v27, %v83
  %v99 = vmul.f32 %v28, %v83
  %v100 = vmul.f32 %v29, %v83
  %v101 = vmul.f32 %v30, %v83
  %v102 = vmul.f32 %v31, %v83
  %v103 = vmul.f32 %v32, %v83
  %v104 = vmul.f32 %v33, %v83
  %v105 = vmul.f32 %v34, %v83
  %v106 = vmul.f32 %v35, %v83
  %v107 = vmul.f32 %v36, %v83
  %v108 = vmul.f32 %v37, %v83
  %v109 = vmul.f32 %v38, %v83
  %v110 = vmul.f32 %v39, %v83
  %v111 = vmul.f32 %v40, %v83
  %v112 = vmul.f32 %v41, %v83
  %v113 = vmul.f32 %v42, %v83
  %v114 = vmul.f32 %v43, %v83
  %v115 = vmul.f32 %v44, %v83
  %v116 = vmul.f32 %v45, %v83
  %v117 = vmul.f32 %v46, %v83
  %v118 = vmul.f32 %v47, %v83
  %v119 = vmul.f32 %v48, %v83
  %v120 = vmul.f32 %v49, %v83
  %v121 = vmul.f32 %v50, %v83
  %v122 = vmul.f32 %v51, %v83
  %v123 = vmul.f32 %v52, %v83
  %v124 = vmul.f32 %v53, %v83
  %v125 = vmul.f32 %v54, %v83
  %v126 = vmul.f32 %v55, %v83
  %v127 = vmul.f32 %v56, %v83
  %v128 = vmul.f32 %v57, %v83
  %v129 = vmul.f32 %v58, %v83
  %v130 = vmul.f32 %v59, %v83
  %v131 = vmul.f32 %v60, %v83
  %v132 = vmul.f32 %v61, %v83
  %v133 = vmul.f32 %v62, %v83
  %v134 = vmul.f32 %v63, %v83
  %v135 = vmul.f32 %v64, %v83
  %v136 = vmul.f32 %v65, %v83
  %v137 = vmul.f32 %v66, %v83
  %v138 = vmul.f32 %v67, %v83
  %v139 = vmul.f32 %v68, %v83
  %v140 = vmul.f32 %v69, %v83
  %v141 = vmul.f32 %v70, %v83
  %v142 = vmul.f32 %v71, %v83
  %v143 = vmul.f32 %v72, %v83
  %v144 = vmul.f32 %v73, %v83
  %v145 = vmul.f32 %v74, %v83
  %v146 = vmul.f32 %v75, %v83
  %v147 = vmul.f32 %v76, %v83
  %v148 = vmul.f32 %v77, %v83
  %v149 = vld [vmem:[%s2] sm:$0x1]
  %v151 = vlaneseq
  %v152 = vshrl.u32 %v151, 7
  %v153 = vsub.s32 0, %v152
  %v154 = vrot.slane %v149, %v153
  %v156 = vadd.f32 %v85, %v154
  %v157 = vadd.f32 %v86, %v154
  %v158 = vadd.f32 %v87, %v154
  %v159 = vadd.f32 %v88, %v154
  %v160 = vadd.f32 %v89, %v154
  %v161 = vadd.f32 %v90, %v154
  %v162 = vadd.f32 %v91, %v154
  %v163 = vadd.f32 %v92, %v154
  %v164 = vadd.f32 %v93, %v154
  %v165 = vadd.f32 %v94, %v154
  %v166 = vadd.f32 %v95, %v154
  %v167 = vadd.f32 %v96, %v154
  %v168 = vadd.f32 %v97, %v154
  %v169 = vadd.f32 %v98, %v154
  %v170 = vadd.f32 %v99, %v154
  %v171 = vadd.f32 %v100, %v154
  %v172 = vadd.f32 %v101, %v154
  %v173 = vadd.f32 %v102, %v154
  %v174 = vadd.f32 %v103, %v154
  %v175 = vadd.f32 %v104, %v154
  %v176 = vadd.f32 %v105, %v154
  %v177 = vadd.f32 %v106, %v154
  %v178 = vadd.f32 %v107, %v154
  %v179 = vadd.f32 %v108, %v154
  %v180 = vadd.f32 %v109, %v154
  %v181 = vadd.f32 %v110, %v154
  %v182 = vadd.f32 %v111, %v154
  %v183 = vadd.f32 %v112, %v154
  %v184 = vadd.f32 %v113, %v154
  %v185 = vadd.f32 %v114, %v154
  %v186 = vadd.f32 %v115, %v154
  %v187 = vadd.f32 %v116, %v154
  %v188 = vadd.f32 %v117, %v154
  %v189 = vadd.f32 %v118, %v154
  %v190 = vadd.f32 %v119, %v154
  %v191 = vadd.f32 %v120, %v154
  %v192 = vadd.f32 %v121, %v154
  %v193 = vadd.f32 %v122, %v154
  %v194 = vadd.f32 %v123, %v154
  %v195 = vadd.f32 %v124, %v154
  %v196 = vadd.f32 %v125, %v154
  %v197 = vadd.f32 %v126, %v154
  %v198 = vadd.f32 %v127, %v154
  %v199 = vadd.f32 %v128, %v154
  %v200 = vadd.f32 %v129, %v154
  %v201 = vadd.f32 %v130, %v154
  %v202 = vadd.f32 %v131, %v154
  %v203 = vadd.f32 %v132, %v154
  %v204 = vadd.f32 %v133, %v154
  %v205 = vadd.f32 %v134, %v154
  %v206 = vadd.f32 %v135, %v154
  %v207 = vadd.f32 %v136, %v154
  %v208 = vadd.f32 %v137, %v154
  %v209 = vadd.f32 %v138, %v154
  %v210 = vadd.f32 %v139, %v154
  %v211 = vadd.f32 %v140, %v154
  %v212 = vadd.f32 %v141, %v154
  %v213 = vadd.f32 %v142, %v154
  %v214 = vadd.f32 %v143, %v154
  %v215 = vadd.f32 %v144, %v154
  %v216 = vadd.f32 %v145, %v154
  %v217 = vadd.f32 %v146, %v154
  %v218 = vadd.f32 %v147, %v154
  %v219 = vadd.f32 %v148, %v154
  %v220 = vmax.f32 %v156, 0.0
  %v221 = vmax.f32 %v157, 0.0
  %v222 = vmax.f32 %v158, 0.0
  %v223 = vmax.f32 %v159, 0.0
  %v224 = vmax.f32 %v160, 0.0
  %v225 = vmax.f32 %v161, 0.0
  %v226 = vmax.f32 %v162, 0.0
  %v227 = vmax.f32 %v163, 0.0
  %v228 = vmax.f32 %v164, 0.0
  %v229 = vmax.f32 %v165, 0.0
  %v230 = vmax.f32 %v166, 0.0
  %v231 = vmax.f32 %v167, 0.0
  %v232 = vmax.f32 %v168, 0.0
  %v233 = vmax.f32 %v169, 0.0
  %v234 = vmax.f32 %v170, 0.0
  %v235 = vmax.f32 %v171, 0.0
  %v236 = vmax.f32 %v172, 0.0
  %v237 = vmax.f32 %v173, 0.0
  %v238 = vmax.f32 %v174, 0.0
  %v239 = vmax.f32 %v175, 0.0
  %v240 = vmax.f32 %v176, 0.0
  %v241 = vmax.f32 %v177, 0.0
  %v242 = vmax.f32 %v178, 0.0
  %v243 = vmax.f32 %v179, 0.0
  %v244 = vmax.f32 %v180, 0.0
  %v245 = vmax.f32 %v181, 0.0
  %v246 = vmax.f32 %v182, 0.0
  %v247 = vmax.f32 %v183, 0.0
  %v248 = vmax.f32 %v184, 0.0
  %v249 = vmax.f32 %v185, 0.0
  %v250 = vmax.f32 %v186, 0.0
  %v251 = vmax.f32 %v187, 0.0
  %v252 = vmax.f32 %v188, 0.0
  %v253 = vmax.f32 %v189, 0.0
  %v254 = vmax.f32 %v190, 0.0
  %v255 = vmax.f32 %v191, 0.0
  %v256 = vmax.f32 %v192, 0.0
  %v257 = vmax.f32 %v193, 0.0
  %v258 = vmax.f32 %v194, 0.0
  %v259 = vmax.f32 %v195, 0.0
  %v260 = vmax.f32 %v196, 0.0
  %v261 = vmax.f32 %v197, 0.0
  %v262 = vmax.f32 %v198, 0.0
  %v263 = vmax.f32 %v199, 0.0
  %v264 = vmax.f32 %v200, 0.0
  %v265 = vmax.f32 %v201, 0.0
  %v266 = vmax.f32 %v202, 0.0
  %v267 = vmax.f32 %v203, 0.0
  %v268 = vmax.f32 %v204, 0.0
  %v269 = vmax.f32 %v205, 0.0
  %v270 = vmax.f32 %v206, 0.0
  %v271 = vmax.f32 %v207, 0.0
  %v272 = vmax.f32 %v208, 0.0
  %v273 = vmax.f32 %v209, 0.0
  %v274 = vmax.f32 %v210, 0.0
  %v275 = vmax.f32 %v211, 0.0
  %v276 = vmax.f32 %v212, 0.0
  %v277 = vmax.f32 %v213, 0.0
  %v278 = vmax.f32 %v214, 0.0
  %v279 = vmax.f32 %v215, 0.0
  %v280 = vmax.f32 %v216, 0.0
  %v281 = vmax.f32 %v217, 0.0
  %v282 = vmax.f32 %v218, 0.0
  %v283 = vmax.f32 %v219, 0.0
  %284 = vst [vmem:[%s3] sm:$0xff] %v220
  %285 = vst [vmem:[%s3 + $0x8] sm:$0xff] %v221
  %286 = vst [vmem:[%s3 + $0x10] sm:$0xff] %v222
  %287 = vst [vmem:[%s3 + $0x18] sm:$0xff] %v223
  %288 = vst [vmem:[%s3 + $0x20] sm:$0xff] %v224
  %289 = vst [vmem:[%s3 + $0x28] sm:$0xff] %v225
  %290 = vst [vmem:[%s3 + $0x30] sm:$0xff] %v226
  %291 = vst [vmem:[%s3 + $0x38] sm:$0xff] %v227
  %292 = vst [vmem:[%s3 + $0x40] sm:$0xff] %v228
  %293 = vst [vmem:[%s3 + $0x48] sm:$0xff] %v229
  %294 = vst [vmem:[%s3 + $0x50] sm:$0xff] %v230
  %295 = vst [vmem:[%s3 + $0x58] sm:$0xff] %v231
  %296 = vst [vmem:[%s3 + $0x60] sm:$0xff] %v232
  %297 = vst [vmem:[%s3 + $0x68] sm:$0xff] %v233
  %298 = vst [vmem:[%s3 + $0x70] sm:$0xff] %v234
  %299 = vst [vmem:[%s3 + $0x78] sm:$0xff] %v235
  %300 = vst [vmem:[%s3 + $0x80] sm:$0xff] %v236
  %301 = vst [vmem:[%s3 + $0x88] sm:$0xff] %v237
  %302 = vst [vmem:[%s3 + $0x90] sm:$0xff] %v238
  %303 = vst [vmem:[%s3 + $0x98] sm:$0xff] %v239
  %304 = vst [vmem:[%s3 + $0xa0] sm:$0xff] %v240
  %305 = vst [vmem:[%s3 + $0xa8] sm:$0xff] %v241
  %306 = vst [vmem:[%s3 + $0xb0] sm:$0xff] %v242
  %307 = vst [vmem:[%s3 + $0xb8] sm:$0xff] %v243
  %308 = vst [vmem:[%s3 + $0xc0] sm:$0xff] %v244
  %309 = vst [vmem:[%s3 + $0xc8] sm:$0xff] %v245
  %310 = vst [vmem:[%s3 + $0xd0] sm:$0xff] %v246
  %311 = vst [vmem:[%s3 + $0xd8] sm:$0xff] %v247
  %312 = vst [vmem:[%s3 + $0xe0] sm:$0xff] %v248
  %313 = vst [vmem:[%s3 + $0xe8] sm:$0xff] %v249
  %314 = vst [vmem:[%s3 + $0xf0] sm:$0xff] %v250
  %315 = vst [vmem:[%s3 + $0xf8] sm:$0xff] %v251
  %316 = vst [vmem:[%s3 + $0x100] sm:$0xff] %v252
  %317 = vst [vmem:[%s3 + $0x108] sm:$0xff] %v253
  %318 = vst [vmem:[%s3 + $0x110] sm:$0xff] %v254
  %319 = vst [vmem:[%s3 + $0x118] sm:$0xff] %v255
  %320 = vst [vmem:[%s3 + $0x120] sm:$0xff] %v256
  %321 = vst [vmem:[%s3 + $0x128] sm:$0xff] %v257
  %322 = vst [vmem:[%s3 + $0x130] sm:$0xff] %v258
  %323 = vst [vmem:[%s3 + $0x138] sm:$0xff] %v259
  %324 = vst [vmem:[%s3 + $0x140] sm:$0xff] %v260
  %325 = vst [vmem:[%s3 + $0x148] sm:$0xff] %v261
  %326 = vst [vmem:[%s3 + $0x150] sm:$0xff] %v262
  %327 = vst [vmem:[%s3 + $0x158] sm:$0xff] %v263
  %328 = vst [vmem:[%s3 + $0x160] sm:$0xff] %v264
  %329 = vst [vmem:[%s3 + $0x168] sm:$0xff] %v265
  %330 = vst [vmem:[%s3 + $0x170] sm:$0xff] %v266
  %331 = vst [vmem:[%s3 + $0x178] sm:$0xff] %v267
  %332 = vst [vmem:[%s3 + $0x180] sm:$0xff] %v268
  %333 = vst [vmem:[%s3 + $0x188] sm:$0xff] %v269
  %334 = vst [vmem:[%s3 + $0x190] sm:$0xff] %v270
  %335 = vst [vmem:[%s3 + $0x198] sm:$0xff] %v271
  %336 = vst [vmem:[%s3 + $0x1a0] sm:$0xff] %v272
  %337 = vst [vmem:[%s3 + $0x1a8] sm:$0xff] %v273
  %338 = vst [vmem:[%s3 + $0x1b0] sm:$0xff] %v274
  %339 = vst [vmem:[%s3 + $0x1b8] sm:$0xff] %v275
  %340 = vst [vmem:[%s3 + $0x1c0] sm:$0xff] %v276
  %341 = vst [vmem:[%s3 + $0x1c8] sm:$0xff] %v277
  %342 = vst [vmem:[%s3 + $0x1d0] sm:$0xff] %v278
  %343 = vst [vmem:[%s3 + $0x1d8] sm:$0xff] %v279
  %344 = vst [vmem:[%s3 + $0x1e0] sm:$0xff] %v280
  %345 = vst [vmem:[%s3 + $0x1e8] sm:$0xff] %v281
  %346 = vst [vmem:[%s3 + $0x1f0] sm:$0xff] %v282
  %347 = vst [vmem:[%s3 + $0x1f8] sm:$0xff] %v283
  // Predicated region
  $region14: #{basic_conv_forward.3} parent=0 // pred_check
    _
  $region15: #{basic_conv_forward.3} parent=0 // pred_check_branch
    %349 = sbr.rel (0) target = $region17
  $region16: #{basic_conv_forward.3} parent=0 // pred_region
    _
  $region17: #{basic_conv_forward.3} parent=0 // pred_fallthru
    _
  // Predicated region
  $region18: #{basic_conv_forward.3} parent=0 // pred_check
    _
  $region19: #{basic_conv_forward.3} parent=0 // pred_check_branch
    %351 = sbr.rel (0) target = $region21
  $region20: #{basic_conv_forward.3} parent=0 // pred_region
    _
  $region21: #{basic_conv_forward.3} parent=0 // pred_fallthru
    _

// kernel: basic_conv_forward.2
$region0: #{basic_conv_forward.2}
  #allocation0 [shape = 'u32[]', space=smem, size = 0x4, offset = 0x4, fixed_abs, tag = 'smem constant byte address 0x4 - core index']
  #allocation1 [shape = 'u32[144,128]{1,0:T(1,128)}', space=vmem, size = 0x12000, scoped, tag = 'internal scratch']
  #allocation2 [shape = 'f32[256,128]{1,0:T(8,128)}', space=vmem, size = 0x20000, scoped, tag = 'scratch operand']
  %s0 = inlined_call_operand.vmem [shape: f32[512,128], index: 0, kind: input, shape index: {}]
  %s1 = inlined_call_operand.vmem [shape: f32[128,128], index: 1, kind: input, shape index: {}]
  %s2 = inlined_call_operand.vmem [shape: f32[512,128], index: 2, kind: output, shape index: {0}]
  %s3 = inlined_call_operand.vmem [shape: f32[16,128], index: 3, kind: output, shape index: {1}]
  %s4 = inlined_call_operand.vmem [shape: f32[16,128], index: 4, kind: output, shape index: {2}]
  %5 = xla_tuple %s2, %s3, %s4
  %s6 = sld [smem:[#allocation0]]
  $region61: #{basic_conv_forward.2} parent=0
    _
  %s8 = ssub.s32 1, %s6
  %s9 = scalar_select 0, %s8, %s6
  loop: start=0, step=1, limit=4
  $region2: #{basic_conv_forward.2} parent=0 // loop_pre_header
    _
  $region3: #{basic_conv_forward.2} parent=0 // loop_header
    %s11 = sphi 0, %s15
    %p12 = scmp.ge.s32.totalorder %s11, 4
    %s18 = sphi 0, %s30
    %s19 = sphi 0, %s26
    %s20 = sphi 0, %s18
    %s21 = sphi 0, %s19
    %s22 = sphi 0, %s20
    %s23 = sphi 0, %s21
    %s35 = sphi 0, %s37
    %s38 = sphi 0, %s35
    %s39 = sphi 0, %s38
    %s55 = sphi 0, %s39
    %s61 = sphi 0, %s63
    %s64 = sphi 0, %s61
    %s65 = sphi 0, %s64
    %s81 = sphi 0, %s65
    %s87 = sphi 0, %s89
    %s90 = sphi 0, %s87
    %s91 = sphi 0, %s90
    %s107 = sphi 0, %s91
    %s113 = sphi 0, %s115
    %s116 = sphi 0, %s113
    %s117 = sphi 0, %s116
    %s133 = sphi 0, %s117
    %s139 = sphi 0, %s141
    %s142 = sphi 0, %s139
    %s143 = sphi 0, %s142
    %s159 = sphi 0, %s143
  $region4: #{basic_conv_forward.2} parent=0 // loop_header_branch
    %14 = sbr.rel (%p12) target = $region8
  $region5: #{basic_conv_forward.2} parent=0 // loop_body
    %s16 = ssub.s32 %s11, 1
    %s17 = ssub.s32 %s11, 2
    %s24 = sadd.s32 1, %s19
    %p25 = scmp.ge.s32.totalorder %s24, 1
    %s26 = scalar_select %p25, 0, %s24
    %s27 = sadd.s32 1, %s18
    %s28 = scalar_select %p25, %s27, %s18
    %p29 = scmp.ge.s32.totalorder %s28, 2
    %s30 = scalar_select %p29, 0, %s28
    %s31 = ssub.s32 %s18, %s30
    %s32 = ssub.s32 %s19, %s26
    %s33 = sor.u32 %s31, %s32
    %p34 = scmp.eq.s32.totalorder %s33, 0
    %s36 = sadd.s32 %s35, 1
    %s37 = scalar_select %p34, %s35, %s36
    %p40 = pneg %p34
    %p41 = scmp.eq.s32.totalorder %s11, 1
    %p42 = por %p40, %p41
    %p43 = scmp.ne.s32.totalorder %s35, %s38
    %p44 = scmp.eq.s32.totalorder %s11, 0
    %p45 = por %p43, %p44
    %p46 = scmp.ne.s32.totalorder %s35, %s38
    %p47 = scmp.eq.s32.totalorder %s16, 1
    %p48 = por %p46, %p47
    %p49 = scmp.ne.s32.totalorder %s38, %s39
    %p50 = scmp.eq.s32.totalorder %s16, 0
    %p51 = por %p49, %p50
    %p52 = scmp.ne.s32.totalorder %s38, %s39
    %p53 = scmp.eq.s32.totalorder %s17, 1
    %p54 = por %p52, %p53
    %p56 = scmp.ne.s32.totalorder %s39, %s55
    %p57 = scmp.eq.s32.totalorder %s17, 0
    %p58 = por %p56, %p57
    %s59 = ssub.s32 %s19, %s26
    %p60 = scmp.eq.s32.totalorder %s59, 0
    %s62 = sadd.s32 %s61, 1
    %s63 = scalar_select %p60, %s61, %s62
    %p66 = pneg %p60
    %p67 = scmp.eq.s32.totalorder %s11, 1
    %p68 = por %p66, %p67
    %p69 = scmp.ne.s32.totalorder %s61, %s64
    %p70 = scmp.eq.s32.totalorder %s11, 0
    %p71 = por %p69, %p70
    %p72 = scmp.ne.s32.totalorder %s61, %s64
    %p73 = scmp.eq.s32.totalorder %s16, 1
    %p74 = por %p72, %p73
    %p75 = scmp.ne.s32.totalorder %s64, %s65
    %p76 = scmp.eq.s32.totalorder %s16, 0
    %p77 = por %p75, %p76
    %p78 = scmp.ne.s32.totalorder %s64, %s65
    %p79 = scmp.eq.s32.totalorder %s17, 1
    %p80 = por %p78, %p79
    %p82 = scmp.ne.s32.totalorder %s65, %s81
    %p83 = scmp.eq.s32.totalorder %s17, 0
    %p84 = por %p82, %p83
    %s85 = ssub.s32 %s18, %s30
    %p86 = scmp.eq.s32.totalorder %s85, 0
    %s88 = sadd.s32 %s87, 1
    %s89 = scalar_select %p86, %s87, %s88
    %p92 = pneg %p86
    %p93 = scmp.eq.s32.totalorder %s11, 1
    %p94 = por %p92, %p93
    %p95 = scmp.ne.s32.totalorder %s87, %s90
    %p96 = scmp.eq.s32.totalorder %s11, 0
    %p97 = por %p95, %p96
    %p98 = scmp.ne.s32.totalorder %s87, %s90
    %p99 = scmp.eq.s32.totalorder %s16, 1
    %p100 = por %p98, %p99
    %p101 = scmp.ne.s32.totalorder %s90, %s91
    %p102 = scmp.eq.s32.totalorder %s16, 0
    %p103 = por %p101, %p102
    %p104 = scmp.ne.s32.totalorder %s90, %s91
    %p105 = scmp.eq.s32.totalorder %s17, 1
    %p106 = por %p104, %p105
    %p108 = scmp.ne.s32.totalorder %s91, %s107
    %p109 = scmp.eq.s32.totalorder %s17, 0
    %p110 = por %p108, %p109
    %s111 = ssub.s32 %s18, %s30
    %p112 = scmp.eq.s32.totalorder %s111, 0
    %s114 = sadd.s32 %s113, 1
    %s115 = scalar_select %p112, %s113, %s114
    %p118 = pneg %p112
    %p119 = scmp.eq.s32.totalorder %s11, 1
    %p120 = por %p118, %p119
    %p121 = scmp.ne.s32.totalorder %s113, %s116
    %p122 = scmp.eq.s32.totalorder %s11, 0
    %p123 = por %p121, %p122
    %p124 = scmp.ne.s32.totalorder %s113, %s116
    %p125 = scmp.eq.s32.totalorder %s16, 1
    %p126 = por %p124, %p125
    %p127 = scmp.ne.s32.totalorder %s116, %s117
    %p128 = scmp.eq.s32.totalorder %s16, 0
    %p129 = por %p127, %p128
    %p130 = scmp.ne.s32.totalorder %s116, %s117
    %p131 = scmp.eq.s32.totalorder %s17, 1
    %p132 = por %p130, %p131
    %p134 = scmp.ne.s32.totalorder %s117, %s133
    %p135 = scmp.eq.s32.totalorder %s17, 0
    %p136 = por %p134, %p135
    %s137 = ssub.s32 %s18, %s30
    %p138 = scmp.eq.s32.totalorder %s137, 0
    %s140 = sadd.s32 %s139, 1
    %s141 = scalar_select %p138, %s139, %s140
    %p144 = pneg %p138
    %p145 = scmp.eq.s32.totalorder %s11, 1
    %p146 = por %p144, %p145
    %p147 = scmp.ne.s32.totalorder %s139, %s142
    %p148 = scmp.eq.s32.totalorder %s11, 0
    %p149 = por %p147, %p148
    %p150 = scmp.ne.s32.totalorder %s139, %s142
    %p151 = scmp.eq.s32.totalorder %s16, 1
    %p152 = por %p150, %p151
    %p153 = scmp.ne.s32.totalorder %s142, %s143
    %p154 = scmp.eq.s32.totalorder %s16, 0
    %p155 = por %p153, %p154
    %p156 = scmp.ne.s32.totalorder %s142, %s143
    %p157 = scmp.eq.s32.totalorder %s17, 1
    %p158 = por %p156, %p157
    %p160 = scmp.ne.s32.totalorder %s143, %s159
    %p161 = scmp.eq.s32.totalorder %s17, 0
    %p162 = por %p160, %p161
    %p163 = scmp.le.s32.totalorder 1, %s11
    %p164 = scmp.lt.s32.totalorder %s11, 3
    %p165 = pnand %p163, %p164
    %p166 = pneg %p165
    // Predicated region
    $region9: #{basic_conv_forward.2} parent=5 // pred_check
      _
    $region10: #{basic_conv_forward.2} parent=5 // pred_check_branch
      %168 = sbr.rel (%p165) target = $region12
    $region11: #{basic_conv_forward.2} parent=5 // pred_region
      %s169 = ssub.s32 %s11, 1
      // Predicated region
      $region13: #{basic_conv_forward.2} parent=11 // pred_check
        %p170 = pneg %p77
      $region14: #{basic_conv_forward.2} parent=11 // pred_check_branch
        %172 = sbr.rel (%p170) target = $region16
      $region15: #{basic_conv_forward.2} parent=11 // pred_region
        %s173 = smul.u32 16, %s21
        %p174 = scmp.lt.s32.totalorder %s173, 15
        %s175 = scalar_select %p174, %s173, 15
        %s176 = smul.addr %s175, 8
        %s177 = scalar_lea.vmem %s1, %s176
        %s178 = smul.u32 16, %s21
      $region16: #{basic_conv_forward.2} parent=11 // pred_fallthru
        _
    $region12: #{basic_conv_forward.2} parent=5 // pred_fallthru
      _
    %p179 = scmp.lt.s32.totalorder %s11, 2
    // Predicated region
    $region17: #{basic_conv_forward.2} parent=5 // pred_check
      %p180 = pneg %p179
    $region18: #{basic_conv_forward.2} parent=5 // pred_check_branch
      %182 = sbr.rel (%p180) target = $region20
    $region19: #{basic_conv_forward.2} parent=5 // pred_region
      // Predicated region
      $region21: #{basic_conv_forward.2} parent=19 // pred_check
        %p183 = pneg %p45
      $region22: #{basic_conv_forward.2} parent=19 // pred_check_branch
        %185 = sbr.rel (%p183) target = $region24
      $region23: #{basic_conv_forward.2} parent=19 // pred_region
        %s186 = smul.u32 32, %s18
        %p187 = scmp.lt.s32.totalorder %s186, 63
        %s188 = scalar_select %p187, %s186, 63
        %p189 = scmp.lt.s32.totalorder %s19, 0
        %s190 = scalar_select %p189, %s19, 0
        %s191 = sadd.s32 %s190, %s188
        %s192 = smul.addr %s191, 8
        %s193 = scalar_lea.vmem %s0, %s192
        %s194 = smul.u32 32, %s18
      $region24: #{basic_conv_forward.2} parent=19 // pred_fallthru
        _
    $region20: #{basic_conv_forward.2} parent=5 // pred_fallthru
      _
    %p195 = scmp.le.s32.totalorder 1, %s11
    %p196 = scmp.lt.s32.totalorder %s11, 3
    %p197 = pnand %p195, %p196
    %p198 = pneg %p197
    // Predicated region
    $region25: #{basic_conv_forward.2} parent=5 // pred_check
      _
    $region26: #{basic_conv_forward.2} parent=5 // pred_check_branch
      %200 = sbr.rel (%p197) target = $region28
    $region27: #{basic_conv_forward.2} parent=5 // pred_region
      %s201 = ssub.s32 %s11, 1
      %s202 = smul.u32 32, %s20
      %p203 = scmp.lt.s32.totalorder %s202, 63
      %s204 = scalar_select %p203, %s202, 63
      %p205 = scmp.lt.s32.totalorder %s21, 0
      %s206 = scalar_select %p205, %s21, 0
      %s207 = sadd.s32 %s206, %s204
      %s208 = smul.addr %s207, 8
      %s209 = scalar_lea.vmem %s0, %s208
      %p210 = pneg %p51
      %p211 = pneg %p48
      %s212 = smul.u32 16, %s21
      %p213 = scmp.lt.s32.totalorder %s212, 15
      %s214 = scalar_select %p213, %s212, 15
      %s215 = smul.addr %s214, 8
      %s216 = scalar_lea.vmem %s1, %s215
      %p217 = pneg %p77
      %p218 = pneg %p74
      %p219 = pneg %p103
      %p220 = pneg %p100
      %s221 = smul.u32 32, %s20
      %p222 = scmp.lt.s32.totalorder %s221, 63
      %s223 = scalar_select %p222, %s221, 63
      %s224 = smul.addr %s223, 8
      %s225 = scalar_lea.vmem %s2, %s224
      %p226 = pneg %p129
      %p227 = pneg %p126
      %p228 = scmp.lt.s32.totalorder %s20, 1
      %s229 = scalar_select %p228, %s20, 1
      %s230 = smul.addr %s229, 8
      %s231 = scalar_lea.vmem %s3, %s230
      %p232 = pneg %p155
      %p233 = pneg %p152
      %p234 = scmp.lt.s32.totalorder %s20, 1
      %s235 = scalar_select %p234, %s20, 1
      %s236 = smul.addr %s235, 8
      %s237 = scalar_lea.vmem %s4, %s236
      %s238 = smul.u32 32, %s20
      %p239 = scmp.lt.s32.totalorder %s238, 63
      %s240 = scalar_select %p239, %s238, 63
      %p241 = scmp.lt.s32.totalorder %s21, 0
      %s242 = scalar_select %p241, %s21, 0
      %s243 = sadd.s32 %s242, %s240
      %s244 = smul.addr %s243, 8
      %s245 = scalar_lea.vmem %s0, %s244
      %s246 = smul.u32 32, %s20
      %s247 = smul.u32 16, %s21
      %p248 = scmp.lt.s32.totalorder %s247, 15
      %s249 = scalar_select %p248, %s247, 15
      %s250 = smul.addr %s249, 8
      %s251 = scalar_lea.vmem %s1, %s250
      %s252 = smul.u32 16, %s21
      %s253 = smul.u32 32, %s20
      %p254 = scmp.lt.s32.totalorder %s253, 63
      %s255 = scalar_select %p254, %s253, 63
      %s256 = smul.addr %s255, 8
      %s257 = scalar_lea.vmem %s2, %s256
      %s258 = smul.u32 32, %s20
      %p259 = scmp.lt.s32.totalorder %s20, 1
      %s260 = scalar_select %p259, %s20, 1
      %s261 = smul.addr %s260, 8
      %s262 = scalar_lea.vmem %s3, %s261
      %p263 = scmp.lt.s32.totalorder %s20, 1
      %s264 = scalar_select %p263, %s20, 1
      %s265 = smul.addr %s264, 8
      %s266 = scalar_lea.vmem %s4, %s265
      %v267 = vld [vmem:[%s245] sm:$0xff]
      %v268 = vld [vmem:[%s245 + $0x8] sm:$0xff]
      %v269 = vld [vmem:[%s245 + $0x10] sm:$0xff]
      %v270 = vld [vmem:[%s245 + $0x18] sm:$0xff]
      %v271 = vld [vmem:[%s245 + $0x20] sm:$0xff]
      %v272 = vld [vmem:[%s245 + $0x28] sm:$0xff]
      %v273 = vld [vmem:[%s245 + $0x30] sm:$0xff]
      %v274 = vld [vmem:[%s245 + $0x38] sm:$0xff]
      %v275 = vld [vmem:[%s245 + $0x40] sm:$0xff]
      %v276 = vld [vmem:[%s245 + $0x48] sm:$0xff]
      %v277 = vld [vmem:[%s245 + $0x50] sm:$0xff]
      %v278 = vld [vmem:[%s245 + $0x58] sm:$0xff]
      %v279 = vld [vmem:[%s245 + $0x60] sm:$0xff]
      %v280 = vld [vmem:[%s245 + $0x68] sm:$0xff]
      %v281 = vld [vmem:[%s245 + $0x70] sm:$0xff]
      %v282 = vld [vmem:[%s245 + $0x78] sm:$0xff]
      %v283 = vld [vmem:[%s245 + $0x80] sm:$0xff]
      %v284 = vld [vmem:[%s245 + $0x88] sm:$0xff]
      %v285 = vld [vmem:[%s245 + $0x90] sm:$0xff]
      %v286 = vld [vmem:[%s245 + $0x98] sm:$0xff]
      %v287 = vld [vmem:[%s245 + $0xa0] sm:$0xff]
      %v288 = vld [vmem:[%s245 + $0xa8] sm:$0xff]
      %v289 = vld [vmem:[%s245 + $0xb0] sm:$0xff]
      %v290 = vld [vmem:[%s245 + $0xb8] sm:$0xff]
      %v291 = vld [vmem:[%s245 + $0xc0] sm:$0xff]
      %v292 = vld [vmem:[%s245 + $0xc8] sm:$0xff]
      %v293 = vld [vmem:[%s245 + $0xd0] sm:$0xff]
      %v294 = vld [vmem:[%s245 + $0xd8] sm:$0xff]
      %v295 = vld [vmem:[%s245 + $0xe0] sm:$0xff]
      %v296 = vld [vmem:[%s245 + $0xe8] sm:$0xff]
      %v297 = vld [vmem:[%s245 + $0xf0] sm:$0xff]
      %v298 = vld [vmem:[%s245 + $0xf8] sm:$0xff]
      %v299 = vld [vmem:[%s251] sm:$0xff]
      %v300 = vld [vmem:[%s251 + $0x8] sm:$0xff]
      %v301 = vld [vmem:[%s251 + $0x10] sm:$0xff]
      %v302 = vld [vmem:[%s251 + $0x18] sm:$0xff]
      %v303 = vld [vmem:[%s251 + $0x20] sm:$0xff]
      %v304 = vld [vmem:[%s251 + $0x28] sm:$0xff]
      %v305 = vld [vmem:[%s251 + $0x30] sm:$0xff]
      %v306 = vld [vmem:[%s251 + $0x38] sm:$0xff]
      %v307 = vld [vmem:[%s251 + $0x40] sm:$0xff]
      %v308 = vld [vmem:[%s251 + $0x48] sm:$0xff]
      %v309 = vld [vmem:[%s251 + $0x50] sm:$0xff]
      %v310 = vld [vmem:[%s251 + $0x58] sm:$0xff]
      %v311 = vld [vmem:[%s251 + $0x60] sm:$0xff]
      %v312 = vld [vmem:[%s251 + $0x68] sm:$0xff]
      %v313 = vld [vmem:[%s251 + $0x70] sm:$0xff]
      %v314 = vld [vmem:[%s251 + $0x78] sm:$0xff]
      %315 = vmatprep.subr.mxu0 0.0
      %316 = vmatpush1.msra.mxu0 %v299
      %317 = vmatprep.subr.mxu0 0.0
      %318 = vmatpush1.msra.mxu0 %v300
      %319 = vmatprep.subr.mxu0 0.0
      %320 = vmatpush1.msra.mxu0 %v301
      %321 = vmatprep.subr.mxu0 0.0
      %322 = vmatpush1.msra.mxu0 %v302
      %323 = vmatprep.subr.mxu0 0.0
      %324 = vmatpush1.msra.mxu0 %v303
      %325 = vmatprep.subr.mxu0 0.0
      %326 = vmatpush1.msra.mxu0 %v304
      %327 = vmatprep.subr.mxu0 0.0
      %328 = vmatpush1.msra.mxu0 %v305
      %329 = vmatprep.subr.mxu0 0.0
      %330 = vmatpush1.msra.mxu0 %v306
      %331 = vmatprep.subr.mxu0 0.0
      %332 = vmatpush1.msra.mxu0 %v307
      %333 = vmatprep.subr.mxu0 0.0
      %334 = vmatpush1.msra.mxu0 %v308
      %335 = vmatprep.subr.mxu0 0.0
      %336 = vmatpush1.msra.mxu0 %v309
      %337 = vmatprep.subr.mxu0 0.0
      %338 = vmatpush1.msra.mxu0 %v310
      %339 = vmatprep.subr.mxu0 0.0
      %340 = vmatpush1.msra.mxu0 %v311
      %341 = vmatprep.subr.mxu0 0.0
      %342 = vmatpush1.msra.mxu0 %v312
      %343 = vmatprep.subr.mxu0 0.0
      %344 = vmatpush1.msra.mxu0 %v313
      %345 = vmatprep.subr.mxu0 0.0
      %346 = vmatpush1.msra.mxu0 %v314
      %347 = vmatprep.subr.mxu0 0.0
      %348 = vmatpush1.msra.mxu0 0.0
      %349 = vmatprep.subr.mxu0 0.0
      %350 = vmatpush1.msra.mxu0 0.0
      %351 = vmatprep.subr.mxu0 0.0
      %352 = vmatpush1.msra.mxu0 0.0
      %353 = vmatprep.subr.mxu0 0.0
      %354 = vmatpush1.msra.mxu0 0.0
      %355 = vmatprep.subr.mxu0 0.0
      %356 = vmatpush1.msra.mxu0 0.0
      %357 = vmatprep.subr.mxu0 0.0
      %358 = vmatpush1.msra.mxu0 0.0
      %359 = vmatprep.subr.mxu0 0.0
      %360 = vmatpush1.msra.mxu0 0.0
      %361 = vmatprep.subr.mxu0 0.0
      %362 = vmatpush1.msra.mxu0 0.0
      %363 = vmatprep.subr.mxu0 0.0
      %364 = vmatpush1.msra.mxu0 0.0
      %365 = vmatprep.subr.mxu0 0.0
      %366 = vmatpush1.msra.mxu0 0.0
      %367 = vmatprep.subr.mxu0 0.0
      %368 = vmatpush1.msra.mxu0 0.0
      %369 = vmatprep.subr.mxu0 0.0
      %370 = vmatpush1.msra.mxu0 0.0
      %371 = vmatprep.subr.mxu0 0.0
      %372 = vmatpush1.msra.mxu0 0.0
      %373 = vmatprep.subr.mxu0 0.0
      %374 = vmatpush1.msra.mxu0 0.0
      %375 = vmatprep.subr.mxu0 0.0
      %376 = vmatpush1.msra.mxu0 0.0
      %377 = vmatprep.subr.mxu0 0.0
      %378 = vmatpush1.msra.mxu0 0.0
      %379 = vmatprep.mubr.f32.mxu0 0.0
      %380 = vmatmul.mubr.f32.gmra.mrb[0].mxu0 %v267
      %v381 = vpop.f32.mrb[0].mxu0
      %v382 = vadd.f32 0.0, %v381
      %v383 = vpop.f32.mrb[0].mxu0
      %384 = vmatprep.mubr.f32.mxu0 0.0
      %385 = vmatmul.mubr.f32.gmra.mrb[0].mxu0 %v268
      %v386 = vpop.f32.mrb[0].mxu0
      %v387 = vadd.f32 0.0, %v386
      %v388 = vpop.f32.mrb[0].mxu0
      %389 = vmatprep.mubr.f32.mxu0 0.0
      %390 = vmatmul.mubr.f32.gmra.mrb[0].mxu0 %v269
      %v391 = vpop.f32.mrb[0].mxu0
      %v392 = vadd.f32 0.0, %v391
      %v393 = vpop.f32.mrb[0].mxu0
      %394 = vmatprep.mubr.f32.mxu0 0.0
      %395 = vmatmul.mubr.f32.gmra.mrb[0].mxu0 %v270
      %v396 = vpop.f32.mrb[0].mxu0
      %v397 = vadd.f32 0.0, %v396
      %v398 = vpop.f32.mrb[0].mxu0
      %399 = vmatprep.mubr.f32.mxu0 0.0
      %400 = vmatmul.mubr.f32.gmra.mrb[0].mxu0 %v271
      %v401 = vpop.f32.mrb[0].mxu0
      %v402 = vadd.f32 0.0, %v401
      %v403 = vpop.f32.mrb[0].mxu0
      %404 = vmatprep.mubr.f32.mxu0 0.0
      %405 = vmatmul.mubr.f32.gmra.mrb[0].mxu0 %v272
      %v406 = vpop.f32.mrb[0].mxu0
      %v407 = vadd.f32 0.0, %v406
      %v408 = vpop.f32.mrb[0].mxu0
      %409 = vmatprep.mubr.f32.mxu0 0.0
      %410 = vmatmul.mubr.f32.gmra.mrb[0].mxu0 %v273
      %v411 = vpop.f32.mrb[0].mxu0
      %v412 = vadd.f32 0.0, %v411
      %v413 = vpop.f32.mrb[0].mxu0
      %414 = vmatprep.mubr.f32.mxu0 0.0
      %415 = vmatmul.mubr.f32.gmra.mrb[0].mxu0 %v274
      %v416 = vpop.f32.mrb[0].mxu0
      %v417 = vadd.f32 0.0, %v416
      %v418 = vpop.f32.mrb[0].mxu0
      %419 = vmatprep.mubr.f32.mxu0 0.0
      %420 = vmatmul.mubr.f32.gmra.mrb[0].mxu0 %v275
      %v421 = vpop.f32.mrb[0].mxu0
      %v422 = vadd.f32 0.0, %v421
      %v423 = vpop.f32.mrb[0].mxu0
      %424 = vmatprep.mubr.f32.mxu0 0.0
      %425 = vmatmul.mubr.f32.gmra.mrb[0].mxu0 %v276
      %v426 = vpop.f32.mrb[0].mxu0
      %v427 = vadd.f32 0.0, %v426
      %v428 = vpop.f32.mrb[0].mxu0
      %429 = vmatprep.mubr.f32.mxu0 0.0
      %430 = vmatmul.mubr.f32.gmra.mrb[0].mxu0 %v277
      %v431 = vpop.f32.mrb[0].mxu0
      %v432 = vadd.f32 0.0, %v431
      %v433 = vpop.f32.mrb[0].mxu0
      %434 = vmatprep.mubr.f32.mxu0 0.0
      %435 = vmatmul.mubr.f32.gmra.mrb[0].mxu0 %v278
      %v436 = vpop.f32.mrb[0].mxu0
      %v437 = vadd.f32 0.0, %v436
      %v438 = vpop.f32.mrb[0].mxu0
      %439 = vmatprep.mubr.f32.mxu0 0.0
      %440 = vmatmul.mubr.f32.gmra.mrb[0].mxu0 %v279
      %v441 = vpop.f32.mrb[0].mxu0
      %v442 = vadd.f32 0.0, %v441
      %v443 = vpop.f32.mrb[0].mxu0
      %444 = vmatprep.mubr.f32.mxu0 0.0
      %445 = vmatmul.mubr.f32.gmra.mrb[0].mxu0 %v280
      %v446 = vpop.f32.mrb[0].mxu0
      %v447 = vadd.f32 0.0, %v446
      %v448 = vpop.f32.mrb[0].mxu0
      %449 = vmatprep.mubr.f32.mxu0 0.0
      %450 = vmatmul.mubr.f32.gmra.mrb[0].mxu0 %v281
      %v451 = vpop.f32.mrb[0].mxu0
      %v452 = vadd.f32 0.0, %v451
      %v453 = vpop.f32.mrb[0].mxu0
      %454 = vmatprep.mubr.f32.mxu0 0.0
      %455 = vmatmul.mubr.f32.gmra.mrb[0].mxu0 %v282
      %v456 = vpop.f32.mrb[0].mxu0
      %v457 = vadd.f32 0.0, %v456
      %v458 = vpop.f32.mrb[0].mxu0
      %459 = vmatprep.mubr.f32.mxu0 0.0
      %460 = vmatmul.mubr.f32.gmra.mrb[0].mxu0 %v283
      %v461 = vpop.f32.mrb[0].mxu0
      %v462 = vadd.f32 0.0, %v461
      %v463 = vpop.f32.mrb[0].mxu0
      %464 = vmatprep.mubr.f32.mxu0 0.0
      %465 = vmatmul.mubr.f32.gmra.mrb[0].mxu0 %v284
      %v466 = vpop.f32.mrb[0].mxu0
      %v467 = vadd.f32 0.0, %v466
      %v468 = vpop.f32.mrb[0].mxu0
      %469 = vmatprep.mubr.f32.mxu0 0.0
      %470 = vmatmul.mubr.f32.gmra.mrb[0].mxu0 %v285
      %v471 = vpop.f32.mrb[0].mxu0
      %v472 = vadd.f32 0.0, %v471
      %v473 = vpop.f32.mrb[0].mxu0
      %474 = vmatprep.mubr.f32.mxu0 0.0
      %475 = vmatmul.mubr.f32.gmra.mrb[0].mxu0 %v286
      %v476 = vpop.f32.mrb[0].mxu0
      %v477 = vadd.f32 0.0, %v476
      %v478 = vpop.f32.mrb[0].mxu0
      %479 = vmatprep.mubr.f32.mxu0 0.0
      %480 = vmatmul.mubr.f32.gmra.mrb[0].mxu0 %v287
      %v481 = vpop.f32.mrb[0].mxu0
      %v482 = vadd.f32 0.0, %v481
      %v483 = vpop.f32.mrb[0].mxu0
      %484 = vmatprep.mubr.f32.mxu0 0.0
      %485 = vmatmul.mubr.f32.gmra.mrb[0].mxu0 %v288
      %v486 = vpop.f32.mrb[0].mxu0
      %v487 = vadd.f32 0.0, %v486
      %v488 = vpop.f32.mrb[0].mxu0
      %489 = vmatprep.mubr.f32.mxu0 0.0
      %490 = vmatmul.mubr.f32.gmra.mrb[0].mxu0 %v289
      %v491 = vpop.f32.mrb[0].mxu0
      %v492 = vadd.f32 0.0, %v491
      %v493 = vpop.f32.mrb[0].mxu0
      %494 = vmatprep.mubr.f32.mxu0 0.0
      %495 = vmatmul.mubr.f32.gmra.mrb[0].mxu0 %v290
      %v496 = vpop.f32.mrb[0].mxu0
      %v497 = vadd.f32 0.0, %v496
      %v498 = vpop.f32.mrb[0].mxu0
      %499 = vmatprep.mubr.f32.mxu0 0.0
      %500 = vmatmul.mubr.f32.gmra.mrb[0].mxu0 %v291
      %v501 = vpop.f32.mrb[0].mxu0
      %v502 = vadd.f32 0.0, %v501
      %v503 = vpop.f32.mrb[0].mxu0
      %504 = vmatprep.mubr.f32.mxu0 0.0
      %505 = vmatmul.mubr.f32.gmra.mrb[0].mxu0 %v292
      %v506 = vpop.f32.mrb[0].mxu0
      %v507 = vadd.f32 0.0, %v506
      %v508 = vpop.f32.mrb[0].mxu0
      %509 = vmatprep.mubr.f32.mxu0 0.0
      %510 = vmatmul.mubr.f32.gmra.mrb[0].mxu0 %v293
      %v511 = vpop.f32.mrb[0].mxu0
      %v512 = vadd.f32 0.0, %v511
      %v513 = vpop.f32.mrb[0].mxu0
      %514 = vmatprep.mubr.f32.mxu0 0.0
      %515 = vmatmul.mubr.f32.gmra.mrb[0].mxu0 %v294
      %v516 = vpop.f32.mrb[0].mxu0
      %v517 = vadd.f32 0.0, %v516
      %v518 = vpop.f32.mrb[0].mxu0
      %519 = vmatprep.mubr.f32.mxu0 0.0
      %520 = vmatmul.mubr.f32.gmra.mrb[0].mxu0 %v295
      %v521 = vpop.f32.mrb[0].mxu0
      %v522 = vadd.f32 0.0, %v521
      %v523 = vpop.f32.mrb[0].mxu0
      %524 = vmatprep.mubr.f32.mxu0 0.0
      %525 = vmatmul.mubr.f32.gmra.mrb[0].mxu0 %v296
      %v526 = vpop.f32.mrb[0].mxu0
      %v527 = vadd.f32 0.0, %v526
      %v528 = vpop.f32.mrb[0].mxu0
      %529 = vmatprep.mubr.f32.mxu0 0.0
      %530 = vmatmul.mubr.f32.gmra.mrb[0].mxu0 %v297
      %v531 = vpop.f32.mrb[0].mxu0
      %v532 = vadd.f32 0.0, %v531
      %v533 = vpop.f32.mrb[0].mxu0
      %534 = vmatprep.mubr.f32.mxu0 0.0
      %535 = vmatmul.mubr.f32.gmra.mrb[0].mxu0 %v298
      %v536 = vpop.f32.mrb[0].mxu0
      %v537 = vadd.f32 0.0, %v536
      %v538 = vpop.f32.mrb[0].mxu0
      %539 = vdwg.mxu0
      %p540 = scmp.eq.s32.totalorder %s21, 0
      // Predicated region
      $region29: #{basic_conv_forward.2} parent=27 // pred_check
        %p541 = pneg %p540
      $region30: #{basic_conv_forward.2} parent=27 // pred_check_branch
        %543 = sbr.rel (%p541) target = $region32
      $region31: #{basic_conv_forward.2} parent=27 // pred_region
        %544 = vst [vmem:[%s257] sm:$0xff] %v382
        %545 = vst [vmem:[%s257 + $0x8] sm:$0xff] %v387
        %546 = vst [vmem:[%s257 + $0x10] sm:$0xff] %v392
        %547 = vst [vmem:[%s257 + $0x18] sm:$0xff] %v397
        %548 = vst [vmem:[%s257 + $0x20] sm:$0xff] %v402
        %549 = vst [vmem:[%s257 + $0x28] sm:$0xff] %v407
        %550 = vst [vmem:[%s257 + $0x30] sm:$0xff] %v412
        %551 = vst [vmem:[%s257 + $0x38] sm:$0xff] %v417
        %552 = vst [vmem:[%s257 + $0x40] sm:$0xff] %v422
        %553 = vst [vmem:[%s257 + $0x48] sm:$0xff] %v427
        %554 = vst [vmem:[%s257 + $0x50] sm:$0xff] %v432
        %555 = vst [vmem:[%s257 + $0x58] sm:$0xff] %v437
        %556 = vst [vmem:[%s257 + $0x60] sm:$0xff] %v442
        %557 = vst [vmem:[%s257 + $0x68] sm:$0xff] %v447
        %558 = vst [vmem:[%s257 + $0x70] sm:$0xff] %v452
        %559 = vst [vmem:[%s257 + $0x78] sm:$0xff] %v457
        %560 = vst [vmem:[%s257 + $0x80] sm:$0xff] %v462
        %561 = vst [vmem:[%s257 + $0x88] sm:$0xff] %v467
        %562 = vst [vmem:[%s257 + $0x90] sm:$0xff] %v472
        %563 = vst [vmem:[%s257 + $0x98] sm:$0xff] %v477
        %564 = vst [vmem:[%s257 + $0xa0] sm:$0xff] %v482
        %565 = vst [vmem:[%s257 + $0xa8] sm:$0xff] %v487
        %566 = vst [vmem:[%s257 + $0xb0] sm:$0xff] %v492
        %567 = vst [vmem:[%s257 + $0xb8] sm:$0xff] %v497
        %568 = vst [vmem:[%s257 + $0xc0] sm:$0xff] %v502
        %569 = vst [vmem:[%s257 + $0xc8] sm:$0xff] %v507
        %570 = vst [vmem:[%s257 + $0xd0] sm:$0xff] %v512
        %571 = vst [vmem:[%s257 + $0xd8] sm:$0xff] %v517
        %572 = vst [vmem:[%s257 + $0xe0] sm:$0xff] %v522
        %573 = vst [vmem:[%s257 + $0xe8] sm:$0xff] %v527
        %574 = vst [vmem:[%s257 + $0xf0] sm:$0xff] %v532
        %575 = vst [vmem:[%s257 + $0xf8] sm:$0xff] %v537
        %v576 = vadd.f32 %v382, %v387
        %v577 = vadd.f32 %v576, %v392
        %v578 = vadd.f32 %v577, %v397
        %v579 = vadd.f32 %v578, %v402
        %v580 = vadd.f32 %v579, %v407
        %v581 = vadd.f32 %v580, %v412
        %v582 = vadd.f32 %v581, %v417
        %v583 = vadd.f32 %v582, %v422
        %v584 = vadd.f32 %v583, %v427
        %v585 = vadd.f32 %v584, %v432
        %v586 = vadd.f32 %v585, %v437
        %v587 = vadd.f32 %v586, %v442
        %v588 = vadd.f32 %v587, %v447
        %v589 = vadd.f32 %v588, %v452
        %v590 = vadd.f32 %v589, %v457
        %v591 = vadd.f32 %v590, %v462
        %v592 = vadd.f32 %v591, %v467
        %v593 = vadd.f32 %v592, %v472
        %v594 = vadd.f32 %v593, %v477
        %v595 = vadd.f32 %v594, %v482
        %v596 = vadd.f32 %v595, %v487
        %v597 = vadd.f32 %v596, %v492
        %v598 = vadd.f32 %v597, %v497
        %v599 = vadd.f32 %v598, %v502
        %v600 = vadd.f32 %v599, %v507
        %v601 = vadd.f32 %v600, %v512
        %v602 = vadd.f32 %v601, %v517
        %v603 = vadd.f32 %v602, %v522
        %v604 = vadd.f32 %v603, %v527
        %v605 = vadd.f32 %v604, %v532
        %v606 = vadd.f32 %v605, %v537
        %v607 = vrot.slane %v606, 4
        %v608 = vadd.f32 %v606, %v607
        %v609 = vrot.slane %v608, 2
        %v610 = vadd.f32 %v608, %v609
        %v611 = vrot.slane %v610, 1
        %v612 = vadd.f32 %v610, %v611
        %v613 = vmul.f32 %v382, %v382
        %v614 = vmul.f32 %v387, %v387
        %v615 = vmul.f32 %v392, %v392
        %v616 = vmul.f32 %v397, %v397
        %v617 = vmul.f32 %v402, %v402
        %v618 = vmul.f32 %v407, %v407
        %v619 = vmul.f32 %v412, %v412
        %v620 = vmul.f32 %v417, %v417
        %v621 = vmul.f32 %v422, %v422
        %v622 = vmul.f32 %v427, %v427
        %v623 = vmul.f32 %v432, %v432
        %v624 = vmul.f32 %v437, %v437
        %v625 = vmul.f32 %v442, %v442
        %v626 = vmul.f32 %v447, %v447
        %v627 = vmul.f32 %v452, %v452
        %v628 = vmul.f32 %v457, %v457
        %v629 = vmul.f32 %v462, %v462
        %v630 = vmul.f32 %v467, %v467
        %v631 = vmul.f32 %v472, %v472
        %v632 = vmul.f32 %v477, %v477
        %v633 = vmul.f32 %v482, %v482
        %v634 = vmul.f32 %v487, %v487
        %v635 = vmul.f32 %v492, %v492
        %v636 = vmul.f32 %v497, %v497
        %v637 = vmul.f32 %v502, %v502
        %v638 = vmul.f32 %v507, %v507
        %v639 = vmul.f32 %v512, %v512
        %v640 = vmul.f32 %v517, %v517
        %v641 = vmul.f32 %v522, %v522
        %v642 = vmul.f32 %v527, %v527
        %v643 = vmul.f32 %v532, %v532
        %v644 = vmul.f32 %v537, %v537
        %v645 = vadd.f32 %v613, %v614
        %v646 = vadd.f32 %v645, %v615
        %v647 = vadd.f32 %v646, %v616
        %v648 = vadd.f32 %v647, %v617
        %v649 = vadd.f32 %v648, %v618
        %v650 = vadd.f32 %v649, %v619
        %v651 = vadd.f32 %v650, %v620
        %v652 = vadd.f32 %v651, %v621
        %v653 = vadd.f32 %v652, %v622
        %v654 = vadd.f32 %v653, %v623
        %v655 = vadd.f32 %v654, %v624
        %v656 = vadd.f32 %v655, %v625
        %v657 = vadd.f32 %v656, %v626
        %v658 = vadd.f32 %v657, %v627
        %v659 = vadd.f32 %v658, %v628
        %v660 = vadd.f32 %v659, %v629
        %v661 = vadd.f32 %v660, %v630
        %v662 = vadd.f32 %v661, %v631
        %v663 = vadd.f32 %v662, %v632
        %v664 = vadd.f32 %v663, %v633
        %v665 = vadd.f32 %v664, %v634
        %v666 = vadd.f32 %v665, %v635
        %v667 = vadd.f32 %v666, %v636
        %v668 = vadd.f32 %v667, %v637
        %v669 = vadd.f32 %v668, %v638
        %v670 = vadd.f32 %v669, %v639
        %v671 = vadd.f32 %v670, %v640
        %v672 = vadd.f32 %v671, %v641
        %v673 = vadd.f32 %v672, %v642
        %v674 = vadd.f32 %v673, %v643
        %v675 = vadd.f32 %v674, %v644
        %v676 = vrot.slane %v675, 4
        %v677 = vadd.f32 %v675, %v676
        %v678 = vrot.slane %v677, 2
        %v679 = vadd.f32 %v677, %v678
        %v680 = vrot.slane %v679, 1
        %v681 = vadd.f32 %v679, %v680
        %682 = vst [vmem:[%s262] sm:$0xff] %v612
        %683 = vst [vmem:[%s266] sm:$0xff] %v681
      $region32: #{basic_conv_forward.2} parent=27 // pred_fallthru
        _
      %s684 = smul.u32 32, %s20
      %p685 = scmp.lt.s32.totalorder %s684, 63
      %s686 = scalar_select %p685, %s684, 63
      %s687 = smul.addr %s686, 8
      %s688 = scalar_lea.vmem %s2, %s687
      %p689 = scmp.lt.s32.totalorder %s20, 1
      %s690 = scalar_select %p689, %s20, 1
      %s691 = smul.addr %s690, 8
      %s692 = scalar_lea.vmem %s3, %s691
      %p693 = scmp.lt.s32.totalorder %s20, 1
      %s694 = scalar_select %p693, %s20, 1
      %s695 = smul.addr %s694, 8
      %s696 = scalar_lea.vmem %s4, %s695
      // Predicated region
      $region33: #{basic_conv_forward.2} parent=27 // pred_check
        %p697 = pneg %p100
      $region34: #{basic_conv_forward.2} parent=27 // pred_check_branch
        %699 = sbr.rel (%p697) target = $region36
      $region35: #{basic_conv_forward.2} parent=27 // pred_region
        %s700 = smul.u32 32, %s20
      $region36: #{basic_conv_forward.2} parent=27 // pred_fallthru
        _
      // Predicated region
      $region37: #{basic_conv_forward.2} parent=27 // pred_check
        %p701 = pneg %p126
      $region38: #{basic_conv_forward.2} parent=27 // pred_check_branch
        %703 = sbr.rel (%p701) target = $region40
      $region39: #{basic_conv_forward.2} parent=27 // pred_region
        _
      $region40: #{basic_conv_forward.2} parent=27 // pred_fallthru
        _
      // Predicated region
      $region41: #{basic_conv_forward.2} parent=27 // pred_check
        %p704 = pneg %p152
      $region42: #{basic_conv_forward.2} parent=27 // pred_check_branch
        %706 = sbr.rel (%p704) target = $region44
      $region43: #{basic_conv_forward.2} parent=27 // pred_region
        _
      $region44: #{basic_conv_forward.2} parent=27 // pred_fallthru
        _
    $region28: #{basic_conv_forward.2} parent=5 // pred_fallthru
      _
    %p707 = scmp.le.s32.totalorder 2, %s11
    // Predicated region
    $region45: #{basic_conv_forward.2} parent=5 // pred_check
      %p708 = pneg %p707
    $region46: #{basic_conv_forward.2} parent=5 // pred_check_branch
      %710 = sbr.rel (%p708) target = $region48
    $region47: #{basic_conv_forward.2} parent=5 // pred_region
      %s711 = ssub.s32 %s11, 2
      // Predicated region
      $region49: #{basic_conv_forward.2} parent=47 // pred_check
        %p712 = pneg %p106
      $region50: #{basic_conv_forward.2} parent=47 // pred_check_branch
        %714 = sbr.rel (%p712) target = $region52
      $region51: #{basic_conv_forward.2} parent=47 // pred_region
        %s715 = smul.u32 32, %s22
        %p716 = scmp.lt.s32.totalorder %s715, 63
        %s717 = scalar_select %p716, %s715, 63
        %s718 = smul.addr %s717, 8
        %s719 = scalar_lea.vmem %s2, %s718
      $region52: #{basic_conv_forward.2} parent=47 // pred_fallthru
        _
      // Predicated region
      $region53: #{basic_conv_forward.2} parent=47 // pred_check
        %p720 = pneg %p132
      $region54: #{basic_conv_forward.2} parent=47 // pred_check_branch
        %722 = sbr.rel (%p720) target = $region56
      $region55: #{basic_conv_forward.2} parent=47 // pred_region
        %p723 = scmp.lt.s32.totalorder %s22, 1
        %s724 = scalar_select %p723, %s22, 1
        %s725 = smul.addr %s724, 8
        %s726 = scalar_lea.vmem %s3, %s725
      $region56: #{basic_conv_forward.2} parent=47 // pred_fallthru
        _
      // Predicated region
      $region57: #{basic_conv_forward.2} parent=47 // pred_check
        %p727 = pneg %p158
      $region58: #{basic_conv_forward.2} parent=47 // pred_check_branch
        %729 = sbr.rel (%p727) target = $region60
      $region59: #{basic_conv_forward.2} parent=47 // pred_region
        %p730 = scmp.lt.s32.totalorder %s22, 1
        %s731 = scalar_select %p730, %s22, 1
        %s732 = smul.addr %s731, 8
        %s733 = scalar_lea.vmem %s4, %s732
      $region60: #{basic_conv_forward.2} parent=47 // pred_fallthru
        _
    $region48: #{basic_conv_forward.2} parent=5 // pred_fallthru
      _
  $region6: #{basic_conv_forward.2} parent=0 // loop_footer
    %s15 = sadd.s32 1, %s11
  $region7: #{basic_conv_forward.2} parent=0 // loop_footer_branch
    %10 = sbr.rel target = $region3
  $region8: #{basic_conv_forward.2} parent=0 // loop_exit
    _

</llo_original>
